<compile_context>
chip_gen: v5e
topology: v5e:2x2
jax: 0.10.0
libtpu: 0.0.40
codegen_flags: <defaults>
</compile_context>

<pallas_src>
import functools
import math

import jax
import jax.numpy as jnp
from jax.experimental import pallas as pl
from jax.experimental.pallas import tpu as pltpu


# ---------------------------------------------------------------------------
# in-kernel helpers (pure jnp, traced inside the kernel body)
# ---------------------------------------------------------------------------
def _erf(x):
    # Abramowitz & Stegun 7.1.26 rational approximation (|err| <= 1.5e-7).
    a1, a2, a3, a4, a5 = 0.254829592, -0.284496736, 1.421413741, -1.453152027, 1.061405429
    p = 0.3275911
    sgn = jnp.where(x >= 0.0, 1.0, -1.0)
    ax = jnp.abs(x)
    d = 1.0 + p * ax
    t = pl.reciprocal(d, approx=True)      # EUP slot instead of a VPU divide
    t = t * (2.0 - d * t)                  # one Newton step -> ~f32-exact reciprocal
    poly = ((((a5 * t + a4) * t + a3) * t + a2) * t + a1) * t
    return sgn * (1.0 - poly * jnp.exp(-ax * ax))


def _gelu_exact(x):
    # PyTorch nn.GELU() default (erf-based, not tanh-approx).
    return 0.5 * x * (1.0 + _erf(x * (1.0 / math.sqrt(2.0))))


def _layernorm(x, gamma, beta, true_dim, eps=1e-5):
    # Single pass of cross-lane reductions: sum and sum-of-squares, divided by the
    # TRUE feature count (padded columns of x are exactly zero so they drop out).
    inv_n = 1.0 / float(true_dim)
    mean = jnp.sum(x, axis=-1, keepdims=True) * inv_n
    msq = jnp.sum(x * x, axis=-1, keepdims=True) * inv_n
    var = msq - mean * mean
    inv = jax.lax.rsqrt(var + eps)
    return (x - mean) * (inv * gamma) + beta


# ---------------------------------------------------------------------------
# the Pallas kernel: whole PolicyMLP forward for one (TILE_S, N_pad) block
# ---------------------------------------------------------------------------
def policy_mlp_kernel(k_dim, mid_true, n_hidden2,       # static python ints
                      xs0_ref,
                      w1_ref, b1_ref, g1_ref, be1_ref,
                      w2_ref, b2_ref, g2_ref, be2_ref,
                      w3_ref, b3_ref,                   # (K, M_pad, N_pad) / (K, 1, N_pad)
                      w4_ref, b4_ref, w5_ref, b5_ref,   # SMEM scalars (net2)
                      out_ref):
    x = xs0_ref[...]                                    # (TS, N_pad) f32
    mm = w1_ref.dtype                                   # f32 (default) or bf16 matmul inputs

    # ---- net1: Linear -> GELU -> LN -> Linear -> GELU -> LN
    h = jnp.dot(x.astype(mm), w1_ref[...],
                preferred_element_type=jnp.float32) + b1_ref[...]
    h = _gelu_exact(h)
    h = _layernorm(h, g1_ref[...], be1_ref[...], mid_true)
    h = jnp.dot(h.astype(mm), w2_ref[...],
                preferred_element_type=jnp.float32) + b2_ref[...]
    h = _gelu_exact(h)
    h = _layernorm(h, g2_ref[...], be2_ref[...], mid_true)
    h = h.astype(mm)

    # ---- third Linear + Tanh fused with net2: never materialize the (TS, K*N) xs1.
    accs = [x * w4_ref[0, j] + b4_ref[0, j] for j in range(n_hidden2)]
    for k in range(k_dim):                              # K small, static unroll
        xs1_k = jnp.tanh(
            jnp.dot(h, w3_ref[k], preferred_element_type=jnp.float32) + b3_ref[k])
        for j in range(n_hidden2):
            accs[j] = accs[j] + xs1_k * w4_ref[1 + k, j]

    out = jnp.zeros_like(x) + b5_ref[0, 0]
    for j in range(n_hidden2):
        out = out + jnp.tanh(accs[j]) * w5_ref[j, 0]
    out_ref[...] = jax.nn.sigmoid(out)                  # (TS, N_pad), lane-dense store


# ---------------------------------------------------------------------------
# wrapper (glue): padding / permutation / tiling + pallas_call
# ---------------------------------------------------------------------------
def _round_up(v, m):
    return ((v + m - 1) // m) * m


def _pad2(a, rows, cols):
    return jnp.pad(a, ((0, rows - a.shape[0]), (0, cols - a.shape[1])))


def policy_mlp_forward(xs0, params, *, tile_s=None, use_bf16_matmul=False):
    (w1, b1, g1, be1, w2, b2, g2, be2, w3, b3, w4, b4, w5, b5) = params
    s_dim, n_dim = xs0.shape
    m_dim = w1.shape[1]
    o_dim = w3.shape[1]
    assert o_dim % n_dim == 0, "out_dim must be a multiple of inp_dim"
    k_dim = o_dim // n_dim
    n_hidden2 = w4.shape[1]                       # = 4

    # lane-dense padding of the feature axes
    n_pad = _round_up(n_dim, 128)
    m_pad = _round_up(m_dim, 128)

    # tile along num_sims: bigger on 128-MiB-VMEM chips (v5e/v6e), smaller on v7x
    if tile_s is None:
        tile_s = 256
        try:
            if pltpu.get_tpu_info().vmem_capacity_bytes >= 128 * 1024 * 1024:
                tile_s = 512
        except Exception:
            pass
        # keep the per-tile activation footprint well inside the scoped-VMEM budget
        per_row_bytes = 4 * (3 * m_pad + (k_dim + 8) * n_pad)
        while tile_s > 8 and tile_s * per_row_bytes > 24 * 1024 * 1024:
            tile_s //= 2
    tile_s = max(8, _round_up(min(tile_s, _round_up(s_dim, 8)), 8))
    s_pad = _round_up(s_dim, tile_s)
    grid = (s_pad // tile_s,)

    mm_dtype = jnp.bfloat16 if use_bf16_matmul else jnp.float32

    # ---- pad / permute parameters (glue only; zero-padded columns stay exactly 0) ----
    x_p = _pad2(xs0, s_pad, n_pad)
    w1_p = _pad2(w1, n_pad, m_pad).astype(mm_dtype)
    w2_p = _pad2(w2, m_pad, m_pad).astype(mm_dtype)
    b1_p, g1_p, be1_p = (_pad2(a, 1, m_pad) for a in (b1, g1, be1))
    b2_p, g2_p, be2_p = (_pad2(a, 1, m_pad) for a in (b2, g2, be2))
    # w3 column order in PyTorch's reshape is (node, k); regroup into K blocks of (M, N)
    w3_kmn = jnp.transpose(w3.reshape(m_dim, n_dim, k_dim), (2, 0, 1))      # (K, M, N)
    w3_p = jnp.pad(w3_kmn,
                   ((0, 0), (0, m_pad - m_dim), (0, n_pad - n_dim))).astype(mm_dtype)
    b3_kn = jnp.transpose(b3.reshape(1, n_dim, k_dim), (2, 0, 1))           # (K, 1, N)
    b3_p = jnp.pad(b3_kn, ((0, 0), (0, 0), (0, n_pad - n_dim)))

    VMEM = pltpu.MemorySpace.VMEM
    SMEM = pltpu.MemorySpace.SMEM

    def resident(arr):
        # whole-array VMEM block with a constant index map -> stays resident across grid
        nd = arr.ndim
        return pl.BlockSpec(arr.shape, lambda i: (0,) * nd, memory_space=VMEM)

    smem_spec = pl.BlockSpec(memory_space=SMEM)   # tiny net2 params, passed whole

    x_spec = pl.BlockSpec((tile_s, n_pad), lambda i: (i, 0), memory_space=VMEM)
    out_spec = pl.BlockSpec((tile_s, n_pad), lambda i: (i, 0), memory_space=VMEM)

    cost = pl.CostEstimate(
        flops=2 * s_pad * (n_pad * m_pad + m_pad * m_pad + k_dim * m_pad * n_pad),
        transcendentals=s_pad * (2 * m_pad + (k_dim + n_hidden2 + 2) * n_pad),
        bytes_accessed=4 * (2 * s_pad * n_pad + n_pad * m_pad + m_pad * m_pad
                            + k_dim * m_pad * n_pad),
    )

    kernel = functools.partial(policy_mlp_kernel, k_dim, m_dim, n_hidden2)
    out_p = pl.pallas_call(
        kernel,
        grid=grid,
        out_shape=jax.ShapeDtypeStruct((s_pad, n_pad), jnp.float32),
        in_specs=[x_spec,
                  resident(w1_p), resident(b1_p), resident(g1_p), resident(be1_p),
                  resident(w2_p), resident(b2_p), resident(g2_p), resident(be2_p),
                  resident(w3_p), resident(b3_p),
                  smem_spec, smem_spec, smem_spec, smem_spec],
        out_specs=out_spec,
        compiler_params=pltpu.CompilerParams(dimension_semantics=("parallel",)),
        cost_estimate=cost,
    )(x_p, w1_p, b1_p, g1_p, be1_p, w2_p, b2_p, g2_p, be2_p, w3_p, b3_p,
      w4, b4, w5, b5)

    return out_p[:s_dim, :n_dim]


# ---------------------------------------------------------------------------
# pure-JAX reference (mirrors the PyTorch forward exactly) for verification
# ---------------------------------------------------------------------------
def policy_mlp_reference(xs0, params):
    (w1, b1, g1, be1, w2, b2, g2, be2, w3, b3, w4, b4, w5, b5) = params
    s_dim, n_dim = xs0.shape

    def ln(x, g, b, eps=1e-5):
        mu = jnp.mean(x, axis=-1, keepdims=True)
        var = jnp.mean((x - mu) ** 2, axis=-1, keepdims=True)
        return (x - mu) / jnp.sqrt(var + eps) * g + b

    def gelu(x):
        return 0.5 * x * (1.0 + jax.scipy.special.erf(x / jnp.sqrt(2.0)))

    h = gelu(xs0 @ w1 + b1)
    h = ln(h, g1, be1)
    h = gelu(h @ w2 + b2)
    h = ln(h, g2, be2)
    xs1 = jnp.tanh(h @ w3 + b3).reshape(s_dim, n_dim, -1)
    xs2 = jnp.concatenate([xs0[:, :, None], xs1], axis=2)
    h2 = jnp.tanh(xs2 @ w4 + b4[0])
    return jax.nn.sigmoid(h2 @ w5 + b5[0])[:, :, 0]


# ---------------------------------------------------------------------------
def init_params(key, inp_dim, mid_dim, out_dim):
    """Deterministic init mimicking nn.Linear's U(-1/sqrt(fan_in), 1/sqrt(fan_in))."""
    k_dim = out_dim // inp_dim
    f_dim = 1 + k_dim
    keys = jax.random.split(key, 10)

    def lin(kw, kb, fan_in, fan_out):
        bound = 1.0 / math.sqrt(fan_in)
        w = jax.random.uniform(kw, (fan_in, fan_out), jnp.float32, -bound, bound)
        b = jax.random.uniform(kb, (1, fan_out), jnp.float32, -bound, bound)
        return w, b

    w1, b1 = lin(keys[0], keys[1], inp_dim, mid_dim)
    w2, b2 = lin(keys[2], keys[3], mid_dim, mid_dim)
    w3, b3 = lin(keys[4], keys[5], mid_dim, out_dim)
    w4, b4 = lin(keys[6], keys[7], f_dim, 4)
    w5, b5 = lin(keys[8], keys[9], 4, 1)
    g1 = jnp.ones((1, mid_dim), jnp.float32)
    be1 = jnp.zeros((1, mid_dim), jnp.float32)
    g2 = jnp.ones((1, mid_dim), jnp.float32)
    be2 = jnp.zeros((1, mid_dim), jnp.float32)
    return (w1, b1, g1, be1, w2, b2, g2, be2, w3, b3, w4, b4, w5, b5)


if __name__ == "__main__":
    # Small shapes consistent with the module's forward:
    #   xs0: (num_sims, num_nodes) with num_nodes == inp_dim, out_dim % inp_dim == 0
    num_sims, inp_dim, mid_dim, out_dim = 8, 16, 32, 64

    key = jax.random.PRNGKey(0)
    k_x, k_p = jax.random.split(key)
    xs0 = jax.random.normal(k_x, (num_sims, inp_dim), jnp.float32)
    params = init_params(k_p, inp_dim, mid_dim, out_dim)

    out = jax.block_until_ready(policy_mlp_forward(xs0, params))
    ref = jax.block_until_ready(policy_mlp_reference(xs0, params))

    assert out.shape == (num_sims, inp_dim)
    max_err = float(jnp.max(jnp.abs(out - ref)))
    assert jnp.allclose(out, ref, atol=1e-4, rtol=1e-4), f"max abs err {max_err}"

    print("KERNEL_OK")
</pallas_src>

<mosaic_0001>
module attributes {stable_mosaic.version = 11 : i64} {
  func.func @policy_mlp_kernel(%arg0: i32, %arg1: memref<8x128xf32, #tpu.memory_space<vmem>>, %arg2: memref<128x128xf32, #tpu.memory_space<vmem>>, %arg3: memref<1x128xf32, #tpu.memory_space<vmem>>, %arg4: memref<1x128xf32, #tpu.memory_space<vmem>>, %arg5: memref<1x128xf32, #tpu.memory_space<vmem>>, %arg6: memref<128x128xf32, #tpu.memory_space<vmem>>, %arg7: memref<1x128xf32, #tpu.memory_space<vmem>>, %arg8: memref<1x128xf32, #tpu.memory_space<vmem>>, %arg9: memref<1x128xf32, #tpu.memory_space<vmem>>, %arg10: memref<4x128x128xf32, #tpu.memory_space<vmem>>, %arg11: memref<4x1x128xf32, #tpu.memory_space<vmem>>, %arg12: memref<5x4xf32, #tpu.memory_space<smem>>, %arg13: memref<1x4xf32, #tpu.memory_space<smem>>, %arg14: memref<4x1xf32, #tpu.memory_space<smem>>, %arg15: memref<1x1xf32, #tpu.memory_space<smem>>, %arg16: memref<8x128xf32, #tpu.memory_space<vmem>>) attributes {dimension_semantics = [#tpu.dimension_semantics<parallel>], iteration_bounds = array<i64: 1>, scalar_prefetch = 0 : i64, scratch_operands = 0 : i64, tpu.core_type = #tpu.core_type<tc>, window_params = [{transform_indices = @transform_0, window_bounds = array<i64: 8, 128>}, {pipeline_mode = #tpu.pipeline_mode<synchronous>, transform_indices = @transform_1, window_bounds = array<i64: 128, 128>}, {pipeline_mode = #tpu.pipeline_mode<synchronous>, transform_indices = @transform_2, window_bounds = array<i64: 1, 128>}, {pipeline_mode = #tpu.pipeline_mode<synchronous>, transform_indices = @transform_3, window_bounds = array<i64: 1, 128>}, {pipeline_mode = #tpu.pipeline_mode<synchronous>, transform_indices = @transform_4, window_bounds = array<i64: 1, 128>}, {pipeline_mode = #tpu.pipeline_mode<synchronous>, transform_indices = @transform_5, window_bounds = array<i64: 128, 128>}, {pipeline_mode = #tpu.pipeline_mode<synchronous>, transform_indices = @transform_6, window_bounds = array<i64: 1, 128>}, {pipeline_mode = #tpu.pipeline_mode<synchronous>, transform_indices = @transform_7, window_bounds = array<i64: 1, 128>}, {pipeline_mode = #tpu.pipeline_mode<synchronous>, transform_indices = @transform_8, window_bounds = array<i64: 1, 128>}, {pipeline_mode = #tpu.pipeline_mode<synchronous>, transform_indices = @transform_9, window_bounds = array<i64: 4, 128, 128>}, {pipeline_mode = #tpu.pipeline_mode<synchronous>, transform_indices = @transform_10, window_bounds = array<i64: 4, 1, 128>}, {transform_indices = @transform_11, window_bounds = array<i64: 5, 4>}, {transform_indices = @transform_12, window_bounds = array<i64: 1, 4>}, {transform_indices = @transform_13, window_bounds = array<i64: 4, 1>}, {transform_indices = @transform_14, window_bounds = array<i64: 1, 1>}, {transform_indices = @transform_15, window_bounds = array<i64: 8, 128>}]} {
    %c0 = arith.constant 0 : index
    %c0_0 = arith.constant 0 : index
    %0 = vector.load %arg1[%c0, %c0_0] : memref<8x128xf32, #tpu.memory_space<vmem>>, vector<8x128xf32>
    %c0_1 = arith.constant 0 : index
    %c0_2 = arith.constant 0 : index
    %1 = vector.load %arg2[%c0_1, %c0_2] : memref<128x128xf32, #tpu.memory_space<vmem>>, vector<128x128xf32>
    %cst = arith.constant dense<0.000000e+00> : vector<8x128xf32>
    %2 = tpu.matmul %0, %1, %cst {dimension_numbers = #tpu.dot_dimension_numbers<[1], [0], [0], [1], [0, 0, 1, 1], [], []>} : vector<8x128xf32>, vector<128x128xf32>, vector<8x128xf32> -> vector<8x128xf32>
    %c0_3 = arith.constant 0 : index
    %c0_4 = arith.constant 0 : index
    %3 = vector.load %arg3[%c0_3, %c0_4] : memref<1x128xf32, #tpu.memory_space<vmem>>, vector<1x128xf32>
    %4 = vector.broadcast %3 : vector<1x128xf32> to vector<8x128xf32>
    %5 = arith.addf %2, %4 : vector<8x128xf32>
    %cst_5 = arith.constant 5.000000e-01 : f32
    %6 = vector.broadcast %cst_5 : f32 to vector<8x128xf32>
    %7 = arith.mulf %6, %5 : vector<8x128xf32>
    %cst_6 = arith.constant 0.707106769 : f32
    %8 = vector.broadcast %cst_6 : f32 to vector<8x128xf32>
    %9 = arith.mulf %5, %8 : vector<8x128xf32>
    %cst_7 = arith.constant 0.000000e+00 : f32
    %10 = vector.broadcast %cst_7 : f32 to vector<8x128xf32>
    %11 = arith.cmpf oge, %9, %10 : vector<8x128xf32>
    %cst_8 = arith.constant 1.000000e+00 : f32
    %cst_9 = arith.constant -1.000000e+00 : f32
    %12 = vector.broadcast %cst_8 : f32 to vector<8x128xf32>
    %13 = vector.broadcast %cst_9 : f32 to vector<8x128xf32>
    %14 = arith.select %11, %12, %13 : vector<8x128xi1>, vector<8x128xf32>
    %15 = math.absf %9 : vector<8x128xf32>
    %cst_10 = arith.constant 0.327591091 : f32
    %16 = vector.broadcast %cst_10 : f32 to vector<8x128xf32>
    %17 = arith.mulf %16, %15 : vector<8x128xf32>
    %cst_11 = arith.constant 1.000000e+00 : f32
    %18 = vector.broadcast %cst_11 : f32 to vector<8x128xf32>
    %19 = arith.addf %18, %17 : vector<8x128xf32>
    %20 = tpu.reciprocal %19 {approx = true} : vector<8x128xf32> -> vector<8x128xf32>
    %21 = arith.mulf %19, %20 : vector<8x128xf32>
    %cst_12 = arith.constant 2.000000e+00 : f32
    %22 = vector.broadcast %cst_12 : f32 to vector<8x128xf32>
    %23 = arith.subf %22, %21 : vector<8x128xf32>
    %24 = arith.mulf %20, %23 : vector<8x128xf32>
    %cst_13 = arith.constant 1.06140542 : f32
    %25 = vector.broadcast %cst_13 : f32 to vector<8x128xf32>
    %26 = arith.mulf %25, %24 : vector<8x128xf32>
    %cst_14 = arith.constant -1.45315206 : f32
    %27 = vector.broadcast %cst_14 : f32 to vector<8x128xf32>
    %28 = arith.addf %26, %27 : vector<8x128xf32>
    %29 = arith.mulf %28, %24 : vector<8x128xf32>
    %cst_15 = arith.constant 1.42141378 : f32
    %30 = vector.broadcast %cst_15 : f32 to vector<8x128xf32>
    %31 = arith.addf %29, %30 : vector<8x128xf32>
    %32 = arith.mulf %31, %24 : vector<8x128xf32>
    %cst_16 = arith.constant -0.284496725 : f32
    %33 = vector.broadcast %cst_16 : f32 to vector<8x128xf32>
    %34 = arith.addf %32, %33 : vector<8x128xf32>
    %35 = arith.mulf %34, %24 : vector<8x128xf32>
    %cst_17 = arith.constant 0.254829586 : f32
    %36 = vector.broadcast %cst_17 : f32 to vector<8x128xf32>
    %37 = arith.addf %35, %36 : vector<8x128xf32>
    %38 = arith.mulf %37, %24 : vector<8x128xf32>
    %cst_18 = arith.constant 0.000000e+00 : f32
    %39 = vector.broadcast %cst_18 : f32 to vector<8x128xf32>
    %40 = arith.subf %39, %15 : vector<8x128xf32>
    %41 = arith.mulf %40, %15 : vector<8x128xf32>
    %42 = math.exp %41 : vector<8x128xf32>
    %43 = arith.mulf %38, %42 : vector<8x128xf32>
    %cst_19 = arith.constant 1.000000e+00 : f32
    %44 = vector.broadcast %cst_19 : f32 to vector<8x128xf32>
    %45 = arith.subf %44, %43 : vector<8x128xf32>
    %46 = arith.mulf %14, %45 : vector<8x128xf32>
    %cst_20 = arith.constant 1.000000e+00 : f32
    %47 = vector.broadcast %cst_20 : f32 to vector<8x128xf32>
    %48 = arith.addf %47, %46 : vector<8x128xf32>
    %49 = arith.mulf %7, %48 : vector<8x128xf32>
    %c0_21 = arith.constant 0 : index
    %c0_22 = arith.constant 0 : index
    %50 = vector.load %arg4[%c0_21, %c0_22] : memref<1x128xf32, #tpu.memory_space<vmem>>, vector<1x128xf32>
    %c0_23 = arith.constant 0 : index
    %c0_24 = arith.constant 0 : index
    %51 = vector.load %arg5[%c0_23, %c0_24] : memref<1x128xf32, #tpu.memory_space<vmem>>, vector<1x128xf32>
    %cst_25 = arith.constant dense<0.000000e+00> : vector<8xf32>
    %52 = vector.multi_reduction <add>, %49, %cst_25 [1] : vector<8x128xf32> to vector<8xf32>
    %53 = vector.shape_cast %52 : vector<8xf32> to vector<8x1xf32>
    %cst_26 = arith.constant 3.125000e-02 : f32
    %54 = vector.broadcast %cst_26 : f32 to vector<8x1xf32>
    %55 = arith.mulf %53, %54 : vector<8x1xf32>
    %56 = arith.mulf %49, %49 : vector<8x128xf32>
    %cst_27 = arith.constant dense<0.000000e+00> : vector<8xf32>
    %57 = vector.multi_reduction <add>, %56, %cst_27 [1] : vector<8x128xf32> to vector<8xf32>
    %58 = vector.shape_cast %57 : vector<8xf32> to vector<8x1xf32>
    %cst_28 = arith.constant 3.125000e-02 : f32
    %59 = vector.broadcast %cst_28 : f32 to vector<8x1xf32>
    %60 = arith.mulf %58, %59 : vector<8x1xf32>
    %61 = arith.mulf %55, %55 : vector<8x1xf32>
    %62 = arith.subf %60, %61 : vector<8x1xf32>
    %cst_29 = arith.constant 9.99999974E-6 : f32
    %63 = vector.broadcast %cst_29 : f32 to vector<8x1xf32>
    %64 = arith.addf %62, %63 : vector<8x1xf32>
    %65 = math.rsqrt %64 : vector<8x1xf32>
    %66 = vector.broadcast %55 : vector<8x1xf32> to vector<8x128xf32>
    %67 = arith.subf %49, %66 : vector<8x128xf32>
    %68 = vector.broadcast %65 : vector<8x1xf32> to vector<8x128xf32>
    %69 = vector.broadcast %50 : vector<1x128xf32> to vector<8x128xf32>
    %70 = arith.mulf %68, %69 : vector<8x128xf32>
    %71 = arith.mulf %67, %70 : vector<8x128xf32>
    %72 = vector.broadcast %51 : vector<1x128xf32> to vector<8x128xf32>
    %73 = arith.addf %71, %72 : vector<8x128xf32>
    %c0_30 = arith.constant 0 : index
    %c0_31 = arith.constant 0 : index
    %74 = vector.load %arg6[%c0_30, %c0_31] : memref<128x128xf32, #tpu.memory_space<vmem>>, vector<128x128xf32>
    %cst_32 = arith.constant dense<0.000000e+00> : vector<8x128xf32>
    %75 = tpu.matmul %73, %74, %cst_32 {dimension_numbers = #tpu.dot_dimension_numbers<[1], [0], [0], [1], [0, 0, 1, 1], [], []>} : vector<8x128xf32>, vector<128x128xf32>, vector<8x128xf32> -> vector<8x128xf32>
    %c0_33 = arith.constant 0 : index
    %c0_34 = arith.constant 0 : index
    %76 = vector.load %arg7[%c0_33, %c0_34] : memref<1x128xf32, #tpu.memory_space<vmem>>, vector<1x128xf32>
    %77 = vector.broadcast %76 : vector<1x128xf32> to vector<8x128xf32>
    %78 = arith.addf %75, %77 : vector<8x128xf32>
    %cst_35 = arith.constant 5.000000e-01 : f32
    %79 = vector.broadcast %cst_35 : f32 to vector<8x128xf32>
    %80 = arith.mulf %79, %78 : vector<8x128xf32>
    %cst_36 = arith.constant 0.707106769 : f32
    %81 = vector.broadcast %cst_36 : f32 to vector<8x128xf32>
    %82 = arith.mulf %78, %81 : vector<8x128xf32>
    %cst_37 = arith.constant 0.000000e+00 : f32
    %83 = vector.broadcast %cst_37 : f32 to vector<8x128xf32>
    %84 = arith.cmpf oge, %82, %83 : vector<8x128xf32>
    %cst_38 = arith.constant 1.000000e+00 : f32
    %cst_39 = arith.constant -1.000000e+00 : f32
    %85 = vector.broadcast %cst_38 : f32 to vector<8x128xf32>
    %86 = vector.broadcast %cst_39 : f32 to vector<8x128xf32>
    %87 = arith.select %84, %85, %86 : vector<8x128xi1>, vector<8x128xf32>
    %88 = math.absf %82 : vector<8x128xf32>
    %cst_40 = arith.constant 0.327591091 : f32
    %89 = vector.broadcast %cst_40 : f32 to vector<8x128xf32>
    %90 = arith.mulf %89, %88 : vector<8x128xf32>
    %cst_41 = arith.constant 1.000000e+00 : f32
    %91 = vector.broadcast %cst_41 : f32 to vector<8x128xf32>
    %92 = arith.addf %91, %90 : vector<8x128xf32>
    %93 = tpu.reciprocal %92 {approx = true} : vector<8x128xf32> -> vector<8x128xf32>
    %94 = arith.mulf %92, %93 : vector<8x128xf32>
    %cst_42 = arith.constant 2.000000e+00 : f32
    %95 = vector.broadcast %cst_42 : f32 to vector<8x128xf32>
    %96 = arith.subf %95, %94 : vector<8x128xf32>
    %97 = arith.mulf %93, %96 : vector<8x128xf32>
    %cst_43 = arith.constant 1.06140542 : f32
    %98 = vector.broadcast %cst_43 : f32 to vector<8x128xf32>
    %99 = arith.mulf %98, %97 : vector<8x128xf32>
    %cst_44 = arith.constant -1.45315206 : f32
    %100 = vector.broadcast %cst_44 : f32 to vector<8x128xf32>
    %101 = arith.addf %99, %100 : vector<8x128xf32>
    %102 = arith.mulf %101, %97 : vector<8x128xf32>
    %cst_45 = arith.constant 1.42141378 : f32
    %103 = vector.broadcast %cst_45 : f32 to vector<8x128xf32>
    %104 = arith.addf %102, %103 : vector<8x128xf32>
    %105 = arith.mulf %104, %97 : vector<8x128xf32>
    %cst_46 = arith.constant -0.284496725 : f32
    %106 = vector.broadcast %cst_46 : f32 to vector<8x128xf32>
    %107 = arith.addf %105, %106 : vector<8x128xf32>
    %108 = arith.mulf %107, %97 : vector<8x128xf32>
    %cst_47 = arith.constant 0.254829586 : f32
    %109 = vector.broadcast %cst_47 : f32 to vector<8x128xf32>
    %110 = arith.addf %108, %109 : vector<8x128xf32>
    %111 = arith.mulf %110, %97 : vector<8x128xf32>
    %cst_48 = arith.constant 0.000000e+00 : f32
    %112 = vector.broadcast %cst_48 : f32 to vector<8x128xf32>
    %113 = arith.subf %112, %88 : vector<8x128xf32>
    %114 = arith.mulf %113, %88 : vector<8x128xf32>
    %115 = math.exp %114 : vector<8x128xf32>
    %116 = arith.mulf %111, %115 : vector<8x128xf32>
    %cst_49 = arith.constant 1.000000e+00 : f32
    %117 = vector.broadcast %cst_49 : f32 to vector<8x128xf32>
    %118 = arith.subf %117, %116 : vector<8x128xf32>
    %119 = arith.mulf %87, %118 : vector<8x128xf32>
    %cst_50 = arith.constant 1.000000e+00 : f32
    %120 = vector.broadcast %cst_50 : f32 to vector<8x128xf32>
    %121 = arith.addf %120, %119 : vector<8x128xf32>
    %122 = arith.mulf %80, %121 : vector<8x128xf32>
    %c0_51 = arith.constant 0 : index
    %c0_52 = arith.constant 0 : index
    %123 = vector.load %arg8[%c0_51, %c0_52] : memref<1x128xf32, #tpu.memory_space<vmem>>, vector<1x128xf32>
    %c0_53 = arith.constant 0 : index
    %c0_54 = arith.constant 0 : index
    %124 = vector.load %arg9[%c0_53, %c0_54] : memref<1x128xf32, #tpu.memory_space<vmem>>, vector<1x128xf32>
    %cst_55 = arith.constant dense<0.000000e+00> : vector<8xf32>
    %125 = vector.multi_reduction <add>, %122, %cst_55 [1] : vector<8x128xf32> to vector<8xf32>
    %126 = vector.shape_cast %125 : vector<8xf32> to vector<8x1xf32>
    %cst_56 = arith.constant 3.125000e-02 : f32
    %127 = vector.broadcast %cst_56 : f32 to vector<8x1xf32>
    %128 = arith.mulf %126, %127 : vector<8x1xf32>
    %129 = arith.mulf %122, %122 : vector<8x128xf32>
    %cst_57 = arith.constant dense<0.000000e+00> : vector<8xf32>
    %130 = vector.multi_reduction <add>, %129, %cst_57 [1] : vector<8x128xf32> to vector<8xf32>
    %131 = vector.shape_cast %130 : vector<8xf32> to vector<8x1xf32>
    %cst_58 = arith.constant 3.125000e-02 : f32
    %132 = vector.broadcast %cst_58 : f32 to vector<8x1xf32>
    %133 = arith.mulf %131, %132 : vector<8x1xf32>
    %134 = arith.mulf %128, %128 : vector<8x1xf32>
    %135 = arith.subf %133, %134 : vector<8x1xf32>
    %cst_59 = arith.constant 9.99999974E-6 : f32
    %136 = vector.broadcast %cst_59 : f32 to vector<8x1xf32>
    %137 = arith.addf %135, %136 : vector<8x1xf32>
    %138 = math.rsqrt %137 : vector<8x1xf32>
    %139 = vector.broadcast %128 : vector<8x1xf32> to vector<8x128xf32>
    %140 = arith.subf %122, %139 : vector<8x128xf32>
    %141 = vector.broadcast %138 : vector<8x1xf32> to vector<8x128xf32>
    %142 = vector.broadcast %123 : vector<1x128xf32> to vector<8x128xf32>
    %143 = arith.mulf %141, %142 : vector<8x128xf32>
    %144 = arith.mulf %140, %143 : vector<8x128xf32>
    %145 = vector.broadcast %124 : vector<1x128xf32> to vector<8x128xf32>
    %146 = arith.addf %144, %145 : vector<8x128xf32>
    %c0_60 = arith.constant 0 : index
    %c0_61 = arith.constant 0 : index
    %147 = memref.load %arg12[%c0_60, %c0_61] : memref<5x4xf32, #tpu.memory_space<smem>>
    %148 = vector.broadcast %147 : f32 to vector<8x128xf32>
    %149 = arith.mulf %0, %148 : vector<8x128xf32>
    %c0_62 = arith.constant 0 : index
    %c0_63 = arith.constant 0 : index
    %150 = memref.load %arg13[%c0_62, %c0_63] : memref<1x4xf32, #tpu.memory_space<smem>>
    %151 = vector.broadcast %150 : f32 to vector<8x128xf32>
    %152 = arith.addf %149, %151 : vector<8x128xf32>
    %c0_64 = arith.constant 0 : index
    %c1 = arith.constant 1 : index
    %153 = memref.load %arg12[%c0_64, %c1] : memref<5x4xf32, #tpu.memory_space<smem>>
    %154 = vector.broadcast %153 : f32 to vector<8x128xf32>
    %155 = arith.mulf %0, %154 : vector<8x128xf32>
    %c0_65 = arith.constant 0 : index
    %c1_66 = arith.constant 1 : index
    %156 = memref.load %arg13[%c0_65, %c1_66] : memref<1x4xf32, #tpu.memory_space<smem>>
    %157 = vector.broadcast %156 : f32 to vector<8x128xf32>
    %158 = arith.addf %155, %157 : vector<8x128xf32>
    %c0_67 = arith.constant 0 : index
    %c2 = arith.constant 2 : index
    %159 = memref.load %arg12[%c0_67, %c2] : memref<5x4xf32, #tpu.memory_space<smem>>
    %160 = vector.broadcast %159 : f32 to vector<8x128xf32>
    %161 = arith.mulf %0, %160 : vector<8x128xf32>
    %c0_68 = arith.constant 0 : index
    %c2_69 = arith.constant 2 : index
    %162 = memref.load %arg13[%c0_68, %c2_69] : memref<1x4xf32, #tpu.memory_space<smem>>
    %163 = vector.broadcast %162 : f32 to vector<8x128xf32>
    %164 = arith.addf %161, %163 : vector<8x128xf32>
    %c0_70 = arith.constant 0 : index
    %c3 = arith.constant 3 : index
    %165 = memref.load %arg12[%c0_70, %c3] : memref<5x4xf32, #tpu.memory_space<smem>>
    %166 = vector.broadcast %165 : f32 to vector<8x128xf32>
    %167 = arith.mulf %0, %166 : vector<8x128xf32>
    %c0_71 = arith.constant 0 : index
    %c3_72 = arith.constant 3 : index
    %168 = memref.load %arg13[%c0_71, %c3_72] : memref<1x4xf32, #tpu.memory_space<smem>>
    %169 = vector.broadcast %168 : f32 to vector<8x128xf32>
    %170 = arith.addf %167, %169 : vector<8x128xf32>
    %c0_73 = arith.constant 0 : index
    %c0_74 = arith.constant 0 : index
    %c0_75 = arith.constant 0 : index
    %171 = vector.load %arg10[%c0_73, %c0_74, %c0_75] : memref<4x128x128xf32, #tpu.memory_space<vmem>>, vector<1x128x128xf32>
    %172 = vector.shape_cast %171 : vector<1x128x128xf32> to vector<128x128xf32>
    %cst_76 = arith.constant dense<0.000000e+00> : vector<8x128xf32>
    %173 = tpu.matmul %146, %172, %cst_76 {dimension_numbers = #tpu.dot_dimension_numbers<[1], [0], [0], [1], [0, 0, 1, 1], [], []>} : vector<8x128xf32>, vector<128x128xf32>, vector<8x128xf32> -> vector<8x128xf32>
    %c0_77 = arith.constant 0 : index
    %c0_78 = arith.constant 0 : index
    %c0_79 = arith.constant 0 : index
    %174 = vector.load %arg11[%c0_77, %c0_78, %c0_79] : memref<4x1x128xf32, #tpu.memory_space<vmem>>, vector<1x1x128xf32>
    %175 = vector.shape_cast %174 : vector<1x1x128xf32> to vector<1x128xf32>
    %176 = vector.broadcast %175 : vector<1x128xf32> to vector<8x128xf32>
    %177 = arith.addf %173, %176 : vector<8x128xf32>
    %178 = math.tanh %177 : vector<8x128xf32>
    %c1_80 = arith.constant 1 : index
    %c0_81 = arith.constant 0 : index
    %179 = memref.load %arg12[%c1_80, %c0_81] : memref<5x4xf32, #tpu.memory_space<smem>>
    %180 = vector.broadcast %179 : f32 to vector<8x128xf32>
    %181 = arith.mulf %178, %180 : vector<8x128xf32>
    %182 = arith.addf %152, %181 : vector<8x128xf32>
    %c1_82 = arith.constant 1 : index
    %c1_83 = arith.constant 1 : index
    %183 = memref.load %arg12[%c1_82, %c1_83] : memref<5x4xf32, #tpu.memory_space<smem>>
    %184 = vector.broadcast %183 : f32 to vector<8x128xf32>
    %185 = arith.mulf %178, %184 : vector<8x128xf32>
    %186 = arith.addf %158, %185 : vector<8x128xf32>
    %c1_84 = arith.constant 1 : index
    %c2_85 = arith.constant 2 : index
    %187 = memref.load %arg12[%c1_84, %c2_85] : memref<5x4xf32, #tpu.memory_space<smem>>
    %188 = vector.broadcast %187 : f32 to vector<8x128xf32>
    %189 = arith.mulf %178, %188 : vector<8x128xf32>
    %190 = arith.addf %164, %189 : vector<8x128xf32>
    %c1_86 = arith.constant 1 : index
    %c3_87 = arith.constant 3 : index
    %191 = memref.load %arg12[%c1_86, %c3_87] : memref<5x4xf32, #tpu.memory_space<smem>>
    %192 = vector.broadcast %191 : f32 to vector<8x128xf32>
    %193 = arith.mulf %178, %192 : vector<8x128xf32>
    %194 = arith.addf %170, %193 : vector<8x128xf32>
    %c1_88 = arith.constant 1 : index
    %c0_89 = arith.constant 0 : index
    %c0_90 = arith.constant 0 : index
    %195 = vector.load %arg10[%c1_88, %c0_89, %c0_90] : memref<4x128x128xf32, #tpu.memory_space<vmem>>, vector<1x128x128xf32>
    %196 = vector.shape_cast %195 : vector<1x128x128xf32> to vector<128x128xf32>
    %cst_91 = arith.constant dense<0.000000e+00> : vector<8x128xf32>
    %197 = tpu.matmul %146, %196, %cst_91 {dimension_numbers = #tpu.dot_dimension_numbers<[1], [0], [0], [1], [0, 0, 1, 1], [], []>} : vector<8x128xf32>, vector<128x128xf32>, vector<8x128xf32> -> vector<8x128xf32>
    %c1_92 = arith.constant 1 : index
    %c0_93 = arith.constant 0 : index
    %c0_94 = arith.constant 0 : index
    %198 = vector.load %arg11[%c1_92, %c0_93, %c0_94] : memref<4x1x128xf32, #tpu.memory_space<vmem>>, vector<1x1x128xf32>
    %199 = vector.shape_cast %198 : vector<1x1x128xf32> to vector<1x128xf32>
    %200 = vector.broadcast %199 : vector<1x128xf32> to vector<8x128xf32>
    %201 = arith.addf %197, %200 : vector<8x128xf32>
    %202 = math.tanh %201 : vector<8x128xf32>
    %c2_95 = arith.constant 2 : index
    %c0_96 = arith.constant 0 : index
    %203 = memref.load %arg12[%c2_95, %c0_96] : memref<5x4xf32, #tpu.memory_space<smem>>
    %204 = vector.broadcast %203 : f32 to vector<8x128xf32>
    %205 = arith.mulf %202, %204 : vector<8x128xf32>
    %206 = arith.addf %182, %205 : vector<8x128xf32>
    %c2_97 = arith.constant 2 : index
    %c1_98 = arith.constant 1 : index
    %207 = memref.load %arg12[%c2_97, %c1_98] : memref<5x4xf32, #tpu.memory_space<smem>>
    %208 = vector.broadcast %207 : f32 to vector<8x128xf32>
    %209 = arith.mulf %202, %208 : vector<8x128xf32>
    %210 = arith.addf %186, %209 : vector<8x128xf32>
    %c2_99 = arith.constant 2 : index
    %c2_100 = arith.constant 2 : index
    %211 = memref.load %arg12[%c2_99, %c2_100] : memref<5x4xf32, #tpu.memory_space<smem>>
    %212 = vector.broadcast %211 : f32 to vector<8x128xf32>
    %213 = arith.mulf %202, %212 : vector<8x128xf32>
    %214 = arith.addf %190, %213 : vector<8x128xf32>
    %c2_101 = arith.constant 2 : index
    %c3_102 = arith.constant 3 : index
    %215 = memref.load %arg12[%c2_101, %c3_102] : memref<5x4xf32, #tpu.memory_space<smem>>
    %216 = vector.broadcast %215 : f32 to vector<8x128xf32>
    %217 = arith.mulf %202, %216 : vector<8x128xf32>
    %218 = arith.addf %194, %217 : vector<8x128xf32>
    %c2_103 = arith.constant 2 : index
    %c0_104 = arith.constant 0 : index
    %c0_105 = arith.constant 0 : index
    %219 = vector.load %arg10[%c2_103, %c0_104, %c0_105] : memref<4x128x128xf32, #tpu.memory_space<vmem>>, vector<1x128x128xf32>
    %220 = vector.shape_cast %219 : vector<1x128x128xf32> to vector<128x128xf32>
    %cst_106 = arith.constant dense<0.000000e+00> : vector<8x128xf32>
    %221 = tpu.matmul %146, %220, %cst_106 {dimension_numbers = #tpu.dot_dimension_numbers<[1], [0], [0], [1], [0, 0, 1, 1], [], []>} : vector<8x128xf32>, vector<128x128xf32>, vector<8x128xf32> -> vector<8x128xf32>
    %c2_107 = arith.constant 2 : index
    %c0_108 = arith.constant 0 : index
    %c0_109 = arith.constant 0 : index
    %222 = vector.load %arg11[%c2_107, %c0_108, %c0_109] : memref<4x1x128xf32, #tpu.memory_space<vmem>>, vector<1x1x128xf32>
    %223 = vector.shape_cast %222 : vector<1x1x128xf32> to vector<1x128xf32>
    %224 = vector.broadcast %223 : vector<1x128xf32> to vector<8x128xf32>
    %225 = arith.addf %221, %224 : vector<8x128xf32>
    %226 = math.tanh %225 : vector<8x128xf32>
    %c3_110 = arith.constant 3 : index
    %c0_111 = arith.constant 0 : index
    %227 = memref.load %arg12[%c3_110, %c0_111] : memref<5x4xf32, #tpu.memory_space<smem>>
    %228 = vector.broadcast %227 : f32 to vector<8x128xf32>
    %229 = arith.mulf %226, %228 : vector<8x128xf32>
    %230 = arith.addf %206, %229 : vector<8x128xf32>
    %c3_112 = arith.constant 3 : index
    %c1_113 = arith.constant 1 : index
    %231 = memref.load %arg12[%c3_112, %c1_113] : memref<5x4xf32, #tpu.memory_space<smem>>
    %232 = vector.broadcast %231 : f32 to vector<8x128xf32>
    %233 = arith.mulf %226, %232 : vector<8x128xf32>
    %234 = arith.addf %210, %233 : vector<8x128xf32>
    %c3_114 = arith.constant 3 : index
    %c2_115 = arith.constant 2 : index
    %235 = memref.load %arg12[%c3_114, %c2_115] : memref<5x4xf32, #tpu.memory_space<smem>>
    %236 = vector.broadcast %235 : f32 to vector<8x128xf32>
    %237 = arith.mulf %226, %236 : vector<8x128xf32>
    %238 = arith.addf %214, %237 : vector<8x128xf32>
    %c3_116 = arith.constant 3 : index
    %c3_117 = arith.constant 3 : index
    %239 = memref.load %arg12[%c3_116, %c3_117] : memref<5x4xf32, #tpu.memory_space<smem>>
    %240 = vector.broadcast %239 : f32 to vector<8x128xf32>
    %241 = arith.mulf %226, %240 : vector<8x128xf32>
    %242 = arith.addf %218, %241 : vector<8x128xf32>
    %c3_118 = arith.constant 3 : index
    %c0_119 = arith.constant 0 : index
    %c0_120 = arith.constant 0 : index
    %243 = vector.load %arg10[%c3_118, %c0_119, %c0_120] : memref<4x128x128xf32, #tpu.memory_space<vmem>>, vector<1x128x128xf32>
    %244 = vector.shape_cast %243 : vector<1x128x128xf32> to vector<128x128xf32>
    %cst_121 = arith.constant dense<0.000000e+00> : vector<8x128xf32>
    %245 = tpu.matmul %146, %244, %cst_121 {dimension_numbers = #tpu.dot_dimension_numbers<[1], [0], [0], [1], [0, 0, 1, 1], [], []>} : vector<8x128xf32>, vector<128x128xf32>, vector<8x128xf32> -> vector<8x128xf32>
    %c3_122 = arith.constant 3 : index
    %c0_123 = arith.constant 0 : index
    %c0_124 = arith.constant 0 : index
    %246 = vector.load %arg11[%c3_122, %c0_123, %c0_124] : memref<4x1x128xf32, #tpu.memory_space<vmem>>, vector<1x1x128xf32>
    %247 = vector.shape_cast %246 : vector<1x1x128xf32> to vector<1x128xf32>
    %248 = vector.broadcast %247 : vector<1x128xf32> to vector<8x128xf32>
    %249 = arith.addf %245, %248 : vector<8x128xf32>
    %250 = math.tanh %249 : vector<8x128xf32>
    %c4 = arith.constant 4 : index
    %c0_125 = arith.constant 0 : index
    %251 = memref.load %arg12[%c4, %c0_125] : memref<5x4xf32, #tpu.memory_space<smem>>
    %252 = vector.broadcast %251 : f32 to vector<8x128xf32>
    %253 = arith.mulf %250, %252 : vector<8x128xf32>
    %254 = arith.addf %230, %253 : vector<8x128xf32>
    %c4_126 = arith.constant 4 : index
    %c1_127 = arith.constant 1 : index
    %255 = memref.load %arg12[%c4_126, %c1_127] : memref<5x4xf32, #tpu.memory_space<smem>>
    %256 = vector.broadcast %255 : f32 to vector<8x128xf32>
    %257 = arith.mulf %250, %256 : vector<8x128xf32>
    %258 = arith.addf %234, %257 : vector<8x128xf32>
    %c4_128 = arith.constant 4 : index
    %c2_129 = arith.constant 2 : index
    %259 = memref.load %arg12[%c4_128, %c2_129] : memref<5x4xf32, #tpu.memory_space<smem>>
    %260 = vector.broadcast %259 : f32 to vector<8x128xf32>
    %261 = arith.mulf %250, %260 : vector<8x128xf32>
    %262 = arith.addf %238, %261 : vector<8x128xf32>
    %c4_130 = arith.constant 4 : index
    %c3_131 = arith.constant 3 : index
    %263 = memref.load %arg12[%c4_130, %c3_131] : memref<5x4xf32, #tpu.memory_space<smem>>
    %264 = vector.broadcast %263 : f32 to vector<8x128xf32>
    %265 = arith.mulf %250, %264 : vector<8x128xf32>
    %266 = arith.addf %242, %265 : vector<8x128xf32>
    %cst_132 = arith.constant 0.000000e+00 : f32
    %267 = vector.broadcast %cst_132 : f32 to vector<8x128xf32>
    %c0_133 = arith.constant 0 : index
    %c0_134 = arith.constant 0 : index
    %268 = memref.load %arg15[%c0_133, %c0_134] : memref<1x1xf32, #tpu.memory_space<smem>>
    %269 = vector.broadcast %268 : f32 to vector<8x128xf32>
    %270 = arith.addf %267, %269 : vector<8x128xf32>
    %271 = math.tanh %254 : vector<8x128xf32>
    %c0_135 = arith.constant 0 : index
    %c0_136 = arith.constant 0 : index
    %272 = memref.load %arg14[%c0_135, %c0_136] : memref<4x1xf32, #tpu.memory_space<smem>>
    %273 = vector.broadcast %272 : f32 to vector<8x128xf32>
    %274 = arith.mulf %271, %273 : vector<8x128xf32>
    %275 = arith.addf %270, %274 : vector<8x128xf32>
    %276 = math.tanh %258 : vector<8x128xf32>
    %c1_137 = arith.constant 1 : index
    %c0_138 = arith.constant 0 : index
    %277 = memref.load %arg14[%c1_137, %c0_138] : memref<4x1xf32, #tpu.memory_space<smem>>
    %278 = vector.broadcast %277 : f32 to vector<8x128xf32>
    %279 = arith.mulf %276, %278 : vector<8x128xf32>
    %280 = arith.addf %275, %279 : vector<8x128xf32>
    %281 = math.tanh %262 : vector<8x128xf32>
    %c2_139 = arith.constant 2 : index
    %c0_140 = arith.constant 0 : index
    %282 = memref.load %arg14[%c2_139, %c0_140] : memref<4x1xf32, #tpu.memory_space<smem>>
    %283 = vector.broadcast %282 : f32 to vector<8x128xf32>
    %284 = arith.mulf %281, %283 : vector<8x128xf32>
    %285 = arith.addf %280, %284 : vector<8x128xf32>
    %286 = math.tanh %266 : vector<8x128xf32>
    %c3_141 = arith.constant 3 : index
    %c0_142 = arith.constant 0 : index
    %287 = memref.load %arg14[%c3_141, %c0_142] : memref<4x1xf32, #tpu.memory_space<smem>>
    %288 = vector.broadcast %287 : f32 to vector<8x128xf32>
    %289 = arith.mulf %286, %288 : vector<8x128xf32>
    %290 = arith.addf %285, %289 : vector<8x128xf32>
    %291 = arith.negf %290 : vector<8x128xf32>
    %292 = math.exp %291 : vector<8x128xf32>
    %cst_143 = arith.constant 1.000000e+00 : f32
    %293 = vector.broadcast %cst_143 : f32 to vector<8x128xf32>
    %294 = arith.addf %293, %292 : vector<8x128xf32>
    %295 = arith.divf %293, %294 : vector<8x128xf32>
    %c0_144 = arith.constant 0 : index
    %c0_145 = arith.constant 0 : index
    %296 = vector.load %arg16[%c0_144, %c0_145] : memref<8x128xf32, #tpu.memory_space<vmem>>, vector<8x128xf32>
    tpu.vector_store %arg16[%c0_144, %c0_145], %295 {strides = array<i32>} : memref<8x128xf32, #tpu.memory_space<vmem>>, vector<8x128xf32>,
    return
  }
  func.func @transform_0(%arg0: i32) -> (i32, i32) {
    %c0_i32 = arith.constant 0 : i32
    %c0_i32_0 = arith.constant 0 : i32
    return %arg0, %c0_i32 : i32, i32
  }
  func.func @transform_1(%arg0: i32) -> (i32, i32) {
    %c0_i32 = arith.constant 0 : i32
    %c0_i32_0 = arith.constant 0 : i32
    %c0_i32_1 = arith.constant 0 : i32
    return %c0_i32, %c0_i32_0 : i32, i32
  }
  func.func @transform_2(%arg0: i32) -> (i32, i32) {
    %c0_i32 = arith.constant 0 : i32
    %c0_i32_0 = arith.constant 0 : i32
    %c0_i32_1 = arith.constant 0 : i32
    return %c0_i32, %c0_i32_0 : i32, i32
  }
  func.func @transform_3(%arg0: i32) -> (i32, i32) {
    %c0_i32 = arith.constant 0 : i32
    %c0_i32_0 = arith.constant 0 : i32
    %c0_i32_1 = arith.constant 0 : i32
    return %c0_i32, %c0_i32_0 : i32, i32
  }
  func.func @transform_4(%arg0: i32) -> (i32, i32) {
    %c0_i32 = arith.constant 0 : i32
    %c0_i32_0 = arith.constant 0 : i32
    %c0_i32_1 = arith.constant 0 : i32
    return %c0_i32, %c0_i32_0 : i32, i32
  }
  func.func @transform_5(%arg0: i32) -> (i32, i32) {
    %c0_i32 = arith.constant 0 : i32
    %c0_i32_0 = arith.constant 0 : i32
    %c0_i32_1 = arith.constant 0 : i32
    return %c0_i32, %c0_i32_0 : i32, i32
  }
  func.func @transform_6(%arg0: i32) -> (i32, i32) {
    %c0_i32 = arith.constant 0 : i32
    %c0_i32_0 = arith.constant 0 : i32
    %c0_i32_1 = arith.constant 0 : i32
    return %c0_i32, %c0_i32_0 : i32, i32
  }
  func.func @transform_7(%arg0: i32) -> (i32, i32) {
    %c0_i32 = arith.constant 0 : i32
    %c0_i32_0 = arith.constant 0 : i32
    %c0_i32_1 = arith.constant 0 : i32
    return %c0_i32, %c0_i32_0 : i32, i32
  }
  func.func @transform_8(%arg0: i32) -> (i32, i32) {
    %c0_i32 = arith.constant 0 : i32
    %c0_i32_0 = arith.constant 0 : i32
    %c0_i32_1 = arith.constant 0 : i32
    return %c0_i32, %c0_i32_0 : i32, i32
  }
  func.func @transform_9(%arg0: i32) -> (i32, i32, i32) {
    %c0_i32 = arith.constant 0 : i32
    %c0_i32_0 = arith.constant 0 : i32
    %c0_i32_1 = arith.constant 0 : i32
    %c0_i32_2 = arith.constant 0 : i32
    return %c0_i32, %c0_i32_0, %c0_i32_1 : i32, i32, i32
  }
  func.func @transform_10(%arg0: i32) -> (i32, i32, i32) {
    %c0_i32 = arith.constant 0 : i32
    %c0_i32_0 = arith.constant 0 : i32
    %c0_i32_1 = arith.constant 0 : i32
    %c0_i32_2 = arith.constant 0 : i32
    return %c0_i32, %c0_i32_0, %c0_i32_1 : i32, i32, i32
  }
  func.func @transform_11(%arg0: i32) -> (i32, i32) {
    %c0_i32 = arith.constant 0 : i32
    %c0_i32_0 = arith.constant 0 : i32
    %c0_i32_1 = arith.constant 0 : i32
    return %c0_i32, %c0_i32_0 : i32, i32
  }
  func.func @transform_12(%arg0: i32) -> (i32, i32) {
    %c0_i32 = arith.constant 0 : i32
    %c0_i32_0 = arith.constant 0 : i32
    %c0_i32_1 = arith.constant 0 : i32
    return %c0_i32, %c0_i32_0 : i32, i32
  }
  func.func @transform_13(%arg0: i32) -> (i32, i32) {
    %c0_i32 = arith.constant 0 : i32
    %c0_i32_0 = arith.constant 0 : i32
    %c0_i32_1 = arith.constant 0 : i32
    return %c0_i32, %c0_i32_0 : i32, i32
  }
  func.func @transform_14(%arg0: i32) -> (i32, i32) {
    %c0_i32 = arith.constant 0 : i32
    %c0_i32_0 = arith.constant 0 : i32
    %c0_i32_1 = arith.constant 0 : i32
    return %c0_i32, %c0_i32_0 : i32, i32
  }
  func.func @transform_15(%arg0: i32) -> (i32, i32) {
    %c0_i32 = arith.constant 0 : i32
    %c0_i32_0 = arith.constant 0 : i32
    return %arg0, %c0_i32 : i32, i32
  }
}

</mosaic_0001>

<llo_original>
// kernel: tpu_custom_call.1
$region0: #{tpu_custom_call.1}
  #allocation0 [shape = 'u32[]', space=smem, size = 0x4, offset = 0x4, fixed_abs, tag = 'smem constant byte address 0x4 - core index']
  #allocation1 [shape = 'u32[72,128]{1,0:T(1,128)}', space=vmem, size = 0x9000, scoped, tag = 'internal scratch']
  #allocation2 [shape = 'f32[1,1]{1,0:T(1,128)S(6)}', space=smem, size = 0x200, scoped, tag = 'scoped memory for tpu_custom_call.1']
  %s0 = inlined_call_operand.vmem [shape: f32[8,128], index: 0, kind: input, shape index: {}]
  %s1 = inlined_call_operand.hbm [shape: f32[128,128], index: 1, kind: input, shape index: {}]
  %s2 = inlined_call_operand.vmem [shape: f32[1,128], index: 2, kind: input, shape index: {}]
  %s3 = inlined_call_operand.vmem [shape: f32[1,128], index: 3, kind: input, shape index: {}]
  %s4 = inlined_call_operand.vmem [shape: f32[1,128], index: 4, kind: input, shape index: {}]
  %s5 = inlined_call_operand.hbm [shape: f32[128,128], index: 5, kind: input, shape index: {}]
  %s6 = inlined_call_operand.vmem [shape: f32[1,128], index: 6, kind: input, shape index: {}]
  %s7 = inlined_call_operand.vmem [shape: f32[1,128], index: 7, kind: input, shape index: {}]
  %s8 = inlined_call_operand.vmem [shape: f32[1,128], index: 8, kind: input, shape index: {}]
  %s9 = inlined_call_operand.hbm [shape: f32[4,128,128], index: 9, kind: input, shape index: {}]
  %s10 = inlined_call_operand.vmem [shape: f32[4,1,128], index: 10, kind: input, shape index: {}]
  %s11 = inlined_call_operand.vmem [shape: f32[5,4], index: 11, kind: input, shape index: {}]
  %s12 = inlined_call_operand.vmem [shape: f32[1,4], index: 12, kind: input, shape index: {}]
  %s13 = inlined_call_operand.vmem [shape: f32[4,1], index: 13, kind: input, shape index: {}]
  %s14 = inlined_call_operand.<no memory space> [shape: f32[1,1], index: 14, kind: input, shape index: {}]
  %s15 = inlined_call_operand.hbm [shape: f32[8,128], index: 15, kind: output, shape index: {}]
  %s16 = sld [smem:[#allocation0]]
  $region94: #{tpu_custom_call.1} parent=0
    _
  %s18 = ssub.s32 1, %s16
  %s19 = scalar_select 0, %s18, %s16
  %20 = sst [smem:[#allocation2]] %s14
  $region1: #{tpu_custom_call.1} parent=0
    #allocation3 [shape = 'u8[65536]{0}', space=vmem, size = 0x10000, scoped, tag = 'input window, operand 1, single buffered']
    #allocation4 [shape = 's32[1]{0}', space=sflag, size = 0x4, scoped, tag = 'scoped memory for tpu_custom_call.1']
    #allocation5 [shape = 's32[1]{0}', space=sflag, size = 0x4, scoped, tag = 'scoped memory for tpu_custom_call.1']
    #allocation6 [shape = 's32[1]{0}', space=sflag, size = 0x4, scoped, tag = 'scoped memory for tpu_custom_call.1']
    #allocation7 [shape = 'u8[65536]{0}', space=vmem, size = 0x10000, scoped, tag = 'input window, operand 5, single buffered']
    #allocation8 [shape = 's32[1]{0}', space=sflag, size = 0x4, scoped, tag = 'scoped memory for tpu_custom_call.1']
    #allocation9 [shape = 'u8[262144]{0}', space=vmem, size = 0x40000, scoped, tag = 'input window, operand 9, single buffered']
    #allocation10 [shape = 'u8[4096]{0}', space=smem, size = 0x1000, scoped, tag = 'input window, operand 11, single buffered']
    #allocation11 [shape = 'u8[512]{0}', space=smem, size = 0x200, scoped, tag = 'input window, operand 12, single buffered']
    #allocation12 [shape = 's32[1]{0}', space=sflag, size = 0x4, scoped, tag = 'scoped memory for tpu_custom_call.1']
    #allocation13 [shape = 'u8[2048]{0}', space=smem, size = 0x800, scoped, tag = 'input window, operand 13, single buffered']
    #allocation14 [shape = 'u8[4096]{0}', space=vmem, size = 0x1000, scoped, tag = 'output window, operand 0, single buffered']
    %21 = vsyncpa [#allocation4], 0
    %22 = vsyncpa [#allocation8], 0
    %23 = vsyncpa [#allocation6], 0
    %24 = vsyncpa [#allocation12], 0
    %25 = vsyncpa [#allocation5], 0
    // Predicated region
    $region2: #{tpu_custom_call.1} parent=1 // pred_check
      _
    $region3: #{tpu_custom_call.1} parent=1 // pred_check_branch
      %27 = sbr.rel (0) target = $region5
    $region4: #{tpu_custom_call.1} parent=1 // pred_region
      _
    $region5: #{tpu_custom_call.1} parent=1 // pred_fallthru
      _
    // Predicated region
    $region6: #{tpu_custom_call.1} parent=1 // pred_check
      _
    $region7: #{tpu_custom_call.1} parent=1 // pred_check_branch
      %29 = sbr.rel (0) target = $region9
    $region8: #{tpu_custom_call.1} parent=1 // pred_region
      %31 = vsyncadd [#allocation4], 0
      %s32 = sshll.u32 %s1, 4
      %s33 = int_to_ptr.hbm [resolvable:$true] %s32
      %s34 = sshll.u32 [#allocation3], 4
      %s35 = int_to_ptr.vmem [resolvable:$true] %s34
      %40 = dma.hbm_to_vmem [thread:$0]  %s33, 2048, %s35, [#allocation4], 128, 128, 8
    $region9: #{tpu_custom_call.1} parent=1 // pred_fallthru
      _
    // Predicated region
    $region10: #{tpu_custom_call.1} parent=1 // pred_check
      _
    $region11: #{tpu_custom_call.1} parent=1 // pred_check_branch
      %42 = sbr.rel (0) target = $region13
    $region12: #{tpu_custom_call.1} parent=1 // pred_region
      _
    $region13: #{tpu_custom_call.1} parent=1 // pred_fallthru
      _
    // Predicated region
    $region14: #{tpu_custom_call.1} parent=1 // pred_check
      _
    $region15: #{tpu_custom_call.1} parent=1 // pred_check_branch
      %44 = sbr.rel (0) target = $region17
    $region16: #{tpu_custom_call.1} parent=1 // pred_region
      _
    $region17: #{tpu_custom_call.1} parent=1 // pred_fallthru
      _
    // Predicated region
    $region18: #{tpu_custom_call.1} parent=1 // pred_check
      _
    $region19: #{tpu_custom_call.1} parent=1 // pred_check_branch
      %46 = sbr.rel (0) target = $region21
    $region20: #{tpu_custom_call.1} parent=1 // pred_region
      _
    $region21: #{tpu_custom_call.1} parent=1 // pred_fallthru
      _
    // Predicated region
    $region22: #{tpu_custom_call.1} parent=1 // pred_check
      _
    $region23: #{tpu_custom_call.1} parent=1 // pred_check_branch
      %48 = sbr.rel (0) target = $region25
    $region24: #{tpu_custom_call.1} parent=1 // pred_region
      %50 = vsyncadd [#allocation8], 0
      %s51 = sshll.u32 %s5, 4
      %s52 = int_to_ptr.hbm [resolvable:$true] %s51
      %s53 = sshll.u32 [#allocation7], 4
      %s54 = int_to_ptr.vmem [resolvable:$true] %s53
      %59 = dma.hbm_to_vmem [thread:$0]  %s52, 2048, %s54, [#allocation8], 128, 128, 8
    $region25: #{tpu_custom_call.1} parent=1 // pred_fallthru
      _
    // Predicated region
    $region26: #{tpu_custom_call.1} parent=1 // pred_check
      _
    $region27: #{tpu_custom_call.1} parent=1 // pred_check_branch
      %61 = sbr.rel (0) target = $region29
    $region28: #{tpu_custom_call.1} parent=1 // pred_region
      _
    $region29: #{tpu_custom_call.1} parent=1 // pred_fallthru
      _
    // Predicated region
    $region30: #{tpu_custom_call.1} parent=1 // pred_check
      _
    $region31: #{tpu_custom_call.1} parent=1 // pred_check_branch
      %63 = sbr.rel (0) target = $region33
    $region32: #{tpu_custom_call.1} parent=1 // pred_region
      _
    $region33: #{tpu_custom_call.1} parent=1 // pred_fallthru
      _
    // Predicated region
    $region34: #{tpu_custom_call.1} parent=1 // pred_check
      _
    $region35: #{tpu_custom_call.1} parent=1 // pred_check_branch
      %65 = sbr.rel (0) target = $region37
    $region36: #{tpu_custom_call.1} parent=1 // pred_region
      _
    $region37: #{tpu_custom_call.1} parent=1 // pred_fallthru
      _
    // Predicated region
    $region38: #{tpu_custom_call.1} parent=1 // pred_check
      _
    $region39: #{tpu_custom_call.1} parent=1 // pred_check_branch
      %67 = sbr.rel (0) target = $region41
    $region40: #{tpu_custom_call.1} parent=1 // pred_region
      %69 = vsyncadd [#allocation8], 0
      %s70 = sshll.u32 %s9, 4
      %s71 = int_to_ptr.hbm [resolvable:$true] %s70
      %s72 = sshll.u32 [#allocation9], 4
      %s73 = int_to_ptr.vmem [resolvable:$true] %s72
      %78 = dma.hbm_to_vmem [thread:$0]  %s71, 8192, %s73, [#allocation8], 128, 128, 8
    $region41: #{tpu_custom_call.1} parent=1 // pred_fallthru
      _
    // Predicated region
    $region42: #{tpu_custom_call.1} parent=1 // pred_check
      _
    $region43: #{tpu_custom_call.1} parent=1 // pred_check_branch
      %80 = sbr.rel (0) target = $region45
    $region44: #{tpu_custom_call.1} parent=1 // pred_region
      _
    $region45: #{tpu_custom_call.1} parent=1 // pred_fallthru
      _
    // Predicated region
    $region46: #{tpu_custom_call.1} parent=1 // pred_check
      _
    $region47: #{tpu_custom_call.1} parent=1 // pred_check_branch
      %82 = sbr.rel (0) target = $region49
    $region48: #{tpu_custom_call.1} parent=1 // pred_region
      %84 = vsyncadd [#allocation6], 0
      %s86 = sshll.u32 %s11, 4
      %s87 = int_to_ptr.vmem [resolvable:$true] %s86
      %89 = dma.vmem_to_smem %s87, 128, [#allocation10], [#allocation6]
    $region49: #{tpu_custom_call.1} parent=1 // pred_fallthru
      _
    // Predicated region
    $region50: #{tpu_custom_call.1} parent=1 // pred_check
      _
    $region51: #{tpu_custom_call.1} parent=1 // pred_check_branch
      %91 = sbr.rel (0) target = $region53
    $region52: #{tpu_custom_call.1} parent=1 // pred_region
      %93 = vsyncadd [#allocation12], 0
      %s95 = sshll.u32 %s12, 4
      %s96 = int_to_ptr.vmem [resolvable:$true] %s95
      %98 = dma.vmem_to_smem %s96, 16, [#allocation11], [#allocation12]
    $region53: #{tpu_custom_call.1} parent=1 // pred_fallthru
      _
    // Predicated region
    $region54: #{tpu_custom_call.1} parent=1 // pred_check
      _
    $region55: #{tpu_custom_call.1} parent=1 // pred_check_branch
      %100 = sbr.rel (0) target = $region57
    $region56: #{tpu_custom_call.1} parent=1 // pred_region
      %102 = vsyncadd [#allocation12], 0
      %s104 = sshll.u32 %s13, 4
      %s105 = int_to_ptr.vmem [resolvable:$true] %s104
      %107 = dma.vmem_to_smem %s105, 64, [#allocation13], [#allocation12]
    $region57: #{tpu_custom_call.1} parent=1 // pred_fallthru
      _
    // Predicated region
    $region58: #{tpu_custom_call.1} parent=1 // pred_check
      _
    $region59: #{tpu_custom_call.1} parent=1 // pred_check_branch
      %109 = sbr.rel (0) target = $region61
    $region60: #{tpu_custom_call.1} parent=1 // pred_region
      _
    $region61: #{tpu_custom_call.1} parent=1 // pred_fallthru
      _
    // Predicated region
    $region62: #{tpu_custom_call.1} parent=1 // pred_check
      _
    $region63: #{tpu_custom_call.1} parent=1 // pred_check_branch
      %111 = sbr.rel (0) target = $region65
    $region64: #{tpu_custom_call.1} parent=1 // pred_region
      %113 = dma.done [#allocation4], 2048
    $region65: #{tpu_custom_call.1} parent=1 // pred_fallthru
      _
    // Predicated region
    $region66: #{tpu_custom_call.1} parent=1 // pred_check
      _
    $region67: #{tpu_custom_call.1} parent=1 // pred_check_branch
      %115 = sbr.rel (0) target = $region69
    $region68: #{tpu_custom_call.1} parent=1 // pred_region
      %117 = dma.done [#allocation8], 2048
    $region69: #{tpu_custom_call.1} parent=1 // pred_fallthru
      _
    // Predicated region
    $region70: #{tpu_custom_call.1} parent=1 // pred_check
      _
    $region71: #{tpu_custom_call.1} parent=1 // pred_check_branch
      %119 = sbr.rel (0) target = $region73
    $region72: #{tpu_custom_call.1} parent=1 // pred_region
      %121 = dma.done [#allocation8], 8192
    $region73: #{tpu_custom_call.1} parent=1 // pred_fallthru
      _
    // Predicated region
    $region74: #{tpu_custom_call.1} parent=1 // pred_check
      _
    $region75: #{tpu_custom_call.1} parent=1 // pred_check_branch
      %123 = sbr.rel (0) target = $region77
    $region76: #{tpu_custom_call.1} parent=1 // pred_region
      %125 = dma.done [#allocation6], 128
    $region77: #{tpu_custom_call.1} parent=1 // pred_fallthru
      _
    // Predicated region
    $region78: #{tpu_custom_call.1} parent=1 // pred_check
      _
    $region79: #{tpu_custom_call.1} parent=1 // pred_check_branch
      %127 = sbr.rel (0) target = $region81
    $region80: #{tpu_custom_call.1} parent=1 // pred_region
      %129 = dma.done [#allocation12], 16
    $region81: #{tpu_custom_call.1} parent=1 // pred_fallthru
      _
    // Predicated region
    $region82: #{tpu_custom_call.1} parent=1 // pred_check
      _
    $region83: #{tpu_custom_call.1} parent=1 // pred_check_branch
      %131 = sbr.rel (0) target = $region85
    $region84: #{tpu_custom_call.1} parent=1 // pred_region
      %133 = dma.done [#allocation12], 64
    $region85: #{tpu_custom_call.1} parent=1 // pred_fallthru
      _
    %134 = sfence
    %v135 = vld [vmem:[%s0] sm:$0xff]
    %v136 = vld [vmem:[#allocation3] sm:$0xff]
    %v137 = vld [vmem:[#allocation3 + $0x8] sm:$0xff]
    %v138 = vld [vmem:[#allocation3 + $0x10] sm:$0xff]
    %v139 = vld [vmem:[#allocation3 + $0x18] sm:$0xff]
    %v140 = vld [vmem:[#allocation3 + $0x20] sm:$0xff]
    %v141 = vld [vmem:[#allocation3 + $0x28] sm:$0xff]
    %v142 = vld [vmem:[#allocation3 + $0x30] sm:$0xff]
    %v143 = vld [vmem:[#allocation3 + $0x38] sm:$0xff]
    %v144 = vld [vmem:[#allocation3 + $0x40] sm:$0xff]
    %v145 = vld [vmem:[#allocation3 + $0x48] sm:$0xff]
    %v146 = vld [vmem:[#allocation3 + $0x50] sm:$0xff]
    %v147 = vld [vmem:[#allocation3 + $0x58] sm:$0xff]
    %v148 = vld [vmem:[#allocation3 + $0x60] sm:$0xff]
    %v149 = vld [vmem:[#allocation3 + $0x68] sm:$0xff]
    %v150 = vld [vmem:[#allocation3 + $0x70] sm:$0xff]
    %v151 = vld [vmem:[#allocation3 + $0x78] sm:$0xff]
    %v152 = vld [vmem:[%s2] sm:$0x1]
    %v154 = vperm.slane %v152, 0
    %156 = vmatpush.msra.mxu0 %v151
    %157 = vmatpush.msra.mxu0 %v150
    %158 = vmatpush.msra.mxu0 %v149
    %159 = vmatpush.msra.mxu0 %v148
    %160 = vmatpush.msra.mxu0 %v147
    %161 = vmatpush.msra.mxu0 %v146
    %162 = vmatpush.msra.mxu0 %v145
    %163 = vmatpush.msra.mxu0 %v144
    %164 = vmatpush.msra.mxu0 %v143
    %165 = vmatpush.msra.mxu0 %v142
    %166 = vmatpush.msra.mxu0 %v141
    %167 = vmatpush.msra.mxu0 %v140
    %168 = vmatpush.msra.mxu0 %v139
    %169 = vmatpush.msra.mxu0 %v138
    %170 = vmatpush.msra.mxu0 %v137
    %171 = vmatpush.msra.mxu0 %v136
    %172 = vmatmul.f32.gmra.mxu0 %v135
    %v173 = vpop.f32.mrf.mxu0
    %v174 = vadd.f32 %v154, %v173
    %175 = vdwg.mxu0
    %v176 = vmul.f32 %v174, 0.5
    %v177 = vmul.f32 %v174, 0.70710677
    %vm178 = vcmp.ge.f32.partialorder %v177, 0.0
    %v179 = vsel %vm178, 1.0, -1.0
    %v180 = vand.u32 2147483647, %v177
    %v181 = vmul.f32 %v180, 0.3275911
    %v182 = vadd.f32 %v181, 1.0
    %v183 = vrcp.pop %v182
    %v184 = vmul.f32 %v182, %v183
    %v185 = vsub.f32 2.0, %v184
    %v186 = vmul.f32 %v183, %v185
    %v187 = vmul.f32 %v186, 1.0614054
    %v188 = vadd.f32 %v187, -1.4531521
    %v189 = vmul.f32 %v188, %v186
    %v190 = vadd.f32 %v189, 1.4214138
    %v191 = vmul.f32 %v190, %v186
    %v192 = vadd.f32 %v191, -0.28449672
    %v193 = vmul.f32 %v192, %v186
    %v194 = vadd.f32 %v193, 0.2548296
    %v195 = vmul.f32 %v194, %v186
    %v196 = vsub.f32 0.0, %v180
    %v197 = vmul.f32 %v196, %v180
    %v198 = vmul.f32 %v197, 1.442695
    %v199 = vpow.pop %v198
    %v200 = vmul.f32 %v195, %v199
    %v201 = vsub.f32 1.0, %v200
    %v202 = vmul.f32 %v179, %v201
    %v203 = vadd.f32 %v202, 1.0
    %v204 = vmul.f32 %v176, %v203
    %v205 = vld [vmem:[%s3] sm:$0x1]
    %v206 = vld [vmem:[%s4] sm:$0x1]
    %207 = vadd.xlane.f32.xlu0 %v204
    %v208 = vpop.xlane.xlu0 %207
    %v209 = vmul.f32 %v208, 0.03125
    %v210 = vmul.f32 %v204, %v204
    %211 = vadd.xlane.f32.xlu0 %v210
    %v212 = vpop.xlane.xlu0 %211
    %v213 = vmul.f32 %v212, 0.03125
    %v214 = vmul.f32 %v209, %v209
    %v215 = vsub.f32 %v213, %v214
    %v216 = vadd.f32 %v215, 1e-05
    %v217 = vrsqrt.pop %v216
    %v218 = vmul.f32 %v217, %v216
    %v219 = vmul.f32 %v218, %v217
    %v220 = vmul.f32 0.5, %v219
    %v221 = vsub.f32 1.5, %v220
    %v222 = vmul.f32 %v217, %v221
    %vm223 = vweird.f32 %v216
    %vm224 = vweird.f32 %v217
    %vm225 = vmor %vm223, %vm224
    %v226 = vsel %vm225, %v217, %v222
    %v227 = vsub.f32 %v204, %v209
    %v229 = vperm.slane %v205, 0
    %v231 = vmul.f32 %v226, %v229
    %v232 = vmul.f32 %v227, %v231
    %v234 = vperm.slane %v206, 0
    %v236 = vadd.f32 %v232, %v234
    %v237 = vld [vmem:[#allocation7] sm:$0xff]
    %v238 = vld [vmem:[#allocation7 + $0x8] sm:$0xff]
    %v239 = vld [vmem:[#allocation7 + $0x10] sm:$0xff]
    %v240 = vld [vmem:[#allocation7 + $0x18] sm:$0xff]
    %v241 = vld [vmem:[#allocation7 + $0x20] sm:$0xff]
    %v242 = vld [vmem:[#allocation7 + $0x28] sm:$0xff]
    %v243 = vld [vmem:[#allocation7 + $0x30] sm:$0xff]
    %v244 = vld [vmem:[#allocation7 + $0x38] sm:$0xff]
    %v245 = vld [vmem:[#allocation7 + $0x40] sm:$0xff]
    %v246 = vld [vmem:[#allocation7 + $0x48] sm:$0xff]
    %v247 = vld [vmem:[#allocation7 + $0x50] sm:$0xff]
    %v248 = vld [vmem:[#allocation7 + $0x58] sm:$0xff]
    %v249 = vld [vmem:[#allocation7 + $0x60] sm:$0xff]
    %v250 = vld [vmem:[#allocation7 + $0x68] sm:$0xff]
    %v251 = vld [vmem:[#allocation7 + $0x70] sm:$0xff]
    %v252 = vld [vmem:[#allocation7 + $0x78] sm:$0xff]
    %v253 = vld [vmem:[%s6] sm:$0x1]
    %v255 = vperm.slane %v253, 0
    %257 = vmatpush.msra.mxu0 %v252
    %258 = vmatpush.msra.mxu0 %v251
    %259 = vmatpush.msra.mxu0 %v250
    %260 = vmatpush.msra.mxu0 %v249
    %261 = vmatpush.msra.mxu0 %v248
    %262 = vmatpush.msra.mxu0 %v247
    %263 = vmatpush.msra.mxu0 %v246
    %264 = vmatpush.msra.mxu0 %v245
    %265 = vmatpush.msra.mxu0 %v244
    %266 = vmatpush.msra.mxu0 %v243
    %267 = vmatpush.msra.mxu0 %v242
    %268 = vmatpush.msra.mxu0 %v241
    %269 = vmatpush.msra.mxu0 %v240
    %270 = vmatpush.msra.mxu0 %v239
    %271 = vmatpush.msra.mxu0 %v238
    %272 = vmatpush.msra.mxu0 %v237
    %273 = vmatmul.f32.gmra.mxu0 %v236
    %v274 = vpop.f32.mrf.mxu0
    %v275 = vadd.f32 %v255, %v274
    %276 = vdwg.mxu0
    %v277 = vmul.f32 %v275, 0.5
    %v278 = vmul.f32 %v275, 0.70710677
    %vm279 = vcmp.ge.f32.partialorder %v278, 0.0
    %v280 = vsel %vm279, 1.0, -1.0
    %v281 = vand.u32 2147483647, %v278
    %v282 = vmul.f32 %v281, 0.3275911
    %v283 = vadd.f32 %v282, 1.0
    %v284 = vrcp.pop %v283
    %v285 = vmul.f32 %v283, %v284
    %v286 = vsub.f32 2.0, %v285
    %v287 = vmul.f32 %v284, %v286
    %v288 = vmul.f32 %v287, 1.0614054
    %v289 = vadd.f32 %v288, -1.4531521
    %v290 = vmul.f32 %v289, %v287
    %v291 = vadd.f32 %v290, 1.4214138
    %v292 = vmul.f32 %v291, %v287
    %v293 = vadd.f32 %v292, -0.28449672
    %v294 = vmul.f32 %v293, %v287
    %v295 = vadd.f32 %v294, 0.2548296
    %v296 = vmul.f32 %v295, %v287
    %v297 = vsub.f32 0.0, %v281
    %v298 = vmul.f32 %v297, %v281
    %v299 = vmul.f32 %v298, 1.442695
    %v300 = vpow.pop %v299
    %v301 = vmul.f32 %v296, %v300
    %v302 = vsub.f32 1.0, %v301
    %v303 = vmul.f32 %v280, %v302
    %v304 = vadd.f32 %v303, 1.0
    %v305 = vmul.f32 %v277, %v304
    %v306 = vld [vmem:[%s7] sm:$0x1]
    %v307 = vld [vmem:[%s8] sm:$0x1]
    %308 = vadd.xlane.f32.xlu0 %v305
    %v309 = vpop.xlane.xlu0 %308
    %v310 = vmul.f32 %v309, 0.03125
    %v311 = vmul.f32 %v305, %v305
    %312 = vadd.xlane.f32.xlu0 %v311
    %v313 = vpop.xlane.xlu0 %312
    %v314 = vmul.f32 %v313, 0.03125
    %v315 = vmul.f32 %v310, %v310
    %v316 = vsub.f32 %v314, %v315
    %v317 = vadd.f32 %v316, 1e-05
    %v318 = vrsqrt.pop %v317
    %v319 = vmul.f32 %v318, %v317
    %v320 = vmul.f32 %v319, %v318
    %v321 = vmul.f32 0.5, %v320
    %v322 = vsub.f32 1.5, %v321
    %v323 = vmul.f32 %v318, %v322
    %vm324 = vweird.f32 %v317
    %vm325 = vweird.f32 %v318
    %vm326 = vmor %vm324, %vm325
    %v327 = vsel %vm326, %v318, %v323
    %v328 = vsub.f32 %v305, %v310
    %v330 = vperm.slane %v306, 0
    %v332 = vmul.f32 %v327, %v330
    %v333 = vmul.f32 %v328, %v332
    %v335 = vperm.slane %v307, 0
    %v337 = vadd.f32 %v333, %v335
    %s338 = sld [smem:[#allocation10]]
    %v339 = vstv %s338
    %v340 = vmul.f32 %v135, %v339
    %s341 = sld [smem:[#allocation11]]
    %v342 = vstv %s341
    %v343 = vadd.f32 %v340, %v342
    %s344 = sld [smem:[#allocation10 + $0x1]]
    %v345 = vstv %s344
    %v346 = vmul.f32 %v135, %v345
    %s347 = sld [smem:[#allocation11 + $0x1]]
    %v348 = vstv %s347
    %v349 = vadd.f32 %v346, %v348
    %s350 = sld [smem:[#allocation10 + $0x2]]
    %v351 = vstv %s350
    %v352 = vmul.f32 %v135, %v351
    %s353 = sld [smem:[#allocation11 + $0x2]]
    %v354 = vstv %s353
    %v355 = vadd.f32 %v352, %v354
    %s356 = sld [smem:[#allocation10 + $0x3]]
    %v357 = vstv %s356
    %v358 = vmul.f32 %v135, %v357
    %s359 = sld [smem:[#allocation11 + $0x3]]
    %v360 = vstv %s359
    %v361 = vadd.f32 %v358, %v360
    %v362 = vld [vmem:[#allocation9] sm:$0xff]
    %v363 = vld [vmem:[#allocation9 + $0x8] sm:$0xff]
    %v364 = vld [vmem:[#allocation9 + $0x10] sm:$0xff]
    %v365 = vld [vmem:[#allocation9 + $0x18] sm:$0xff]
    %v366 = vld [vmem:[#allocation9 + $0x20] sm:$0xff]
    %v367 = vld [vmem:[#allocation9 + $0x28] sm:$0xff]
    %v368 = vld [vmem:[#allocation9 + $0x30] sm:$0xff]
    %v369 = vld [vmem:[#allocation9 + $0x38] sm:$0xff]
    %v370 = vld [vmem:[#allocation9 + $0x40] sm:$0xff]
    %v371 = vld [vmem:[#allocation9 + $0x48] sm:$0xff]
    %v372 = vld [vmem:[#allocation9 + $0x50] sm:$0xff]
    %v373 = vld [vmem:[#allocation9 + $0x58] sm:$0xff]
    %v374 = vld [vmem:[#allocation9 + $0x60] sm:$0xff]
    %v375 = vld [vmem:[#allocation9 + $0x68] sm:$0xff]
    %v376 = vld [vmem:[#allocation9 + $0x70] sm:$0xff]
    %v377 = vld [vmem:[#allocation9 + $0x78] sm:$0xff]
    %v378 = vld [vmem:[%s10] sm:$0x1]
    %v380 = vperm.slane %v378, 0
    %382 = vmatpush.msra.mxu0 %v377
    %383 = vmatpush.msra.mxu0 %v376
    %384 = vmatpush.msra.mxu0 %v375
    %385 = vmatpush.msra.mxu0 %v374
    %386 = vmatpush.msra.mxu0 %v373
    %387 = vmatpush.msra.mxu0 %v372
    %388 = vmatpush.msra.mxu0 %v371
    %389 = vmatpush.msra.mxu0 %v370
    %390 = vmatpush.msra.mxu0 %v369
    %391 = vmatpush.msra.mxu0 %v368
    %392 = vmatpush.msra.mxu0 %v367
    %393 = vmatpush.msra.mxu0 %v366
    %394 = vmatpush.msra.mxu0 %v365
    %395 = vmatpush.msra.mxu0 %v364
    %396 = vmatpush.msra.mxu0 %v363
    %397 = vmatpush.msra.mxu0 %v362
    %398 = vmatmul.f32.gmra.mxu0 %v337
    %v399 = vpop.f32.mrf.mxu0
    %v400 = vadd.f32 %v380, %v399
    %401 = vdwg.mxu0
    %v402 = vtanh.pop %v400
    %s403 = sld [smem:[#allocation10 + $0x80]]
    %v404 = vstv %s403
    %v405 = vmul.f32 %v402, %v404
    %v406 = vadd.f32 %v343, %v405
    %s407 = sld [smem:[#allocation10 + $0x81]]
    %v408 = vstv %s407
    %v409 = vmul.f32 %v402, %v408
    %v410 = vadd.f32 %v349, %v409
    %s411 = sld [smem:[#allocation10 + $0x82]]
    %v412 = vstv %s411
    %v413 = vmul.f32 %v402, %v412
    %v414 = vadd.f32 %v355, %v413
    %s415 = sld [smem:[#allocation10 + $0x83]]
    %v416 = vstv %s415
    %v417 = vmul.f32 %v402, %v416
    %v418 = vadd.f32 %v361, %v417
    %s419 = scalar_lea.vmem [#allocation9], 128
    %v420 = vld [vmem:[%s419] sm:$0xff]
    %v421 = vld [vmem:[%s419 + $0x8] sm:$0xff]
    %v422 = vld [vmem:[%s419 + $0x10] sm:$0xff]
    %v423 = vld [vmem:[%s419 + $0x18] sm:$0xff]
    %v424 = vld [vmem:[%s419 + $0x20] sm:$0xff]
    %v425 = vld [vmem:[%s419 + $0x28] sm:$0xff]
    %v426 = vld [vmem:[%s419 + $0x30] sm:$0xff]
    %v427 = vld [vmem:[%s419 + $0x38] sm:$0xff]
    %v428 = vld [vmem:[%s419 + $0x40] sm:$0xff]
    %v429 = vld [vmem:[%s419 + $0x48] sm:$0xff]
    %v430 = vld [vmem:[%s419 + $0x50] sm:$0xff]
    %v431 = vld [vmem:[%s419 + $0x58] sm:$0xff]
    %v432 = vld [vmem:[%s419 + $0x60] sm:$0xff]
    %v433 = vld [vmem:[%s419 + $0x68] sm:$0xff]
    %v434 = vld [vmem:[%s419 + $0x70] sm:$0xff]
    %v435 = vld [vmem:[%s419 + $0x78] sm:$0xff]
    %s436 = scalar_lea.vmem %s10, 1
    %v437 = vld [vmem:[%s436] sm:$0x1]
    %v439 = vperm.slane %v437, 0
    %441 = vmatpush.msra.mxu0 %v435
    %442 = vmatpush.msra.mxu0 %v434
    %443 = vmatpush.msra.mxu0 %v433
    %444 = vmatpush.msra.mxu0 %v432
    %445 = vmatpush.msra.mxu0 %v431
    %446 = vmatpush.msra.mxu0 %v430
    %447 = vmatpush.msra.mxu0 %v429
    %448 = vmatpush.msra.mxu0 %v428
    %449 = vmatpush.msra.mxu0 %v427
    %450 = vmatpush.msra.mxu0 %v426
    %451 = vmatpush.msra.mxu0 %v425
    %452 = vmatpush.msra.mxu0 %v424
    %453 = vmatpush.msra.mxu0 %v423
    %454 = vmatpush.msra.mxu0 %v422
    %455 = vmatpush.msra.mxu0 %v421
    %456 = vmatpush.msra.mxu0 %v420
    %457 = vmatmul.f32.gmra.mxu0 %v337
    %v458 = vpop.f32.mrf.mxu0
    %v459 = vadd.f32 %v439, %v458
    %460 = vdwg.mxu0
    %v461 = vtanh.pop %v459
    %s462 = sld [smem:[#allocation10 + $0x100]]
    %v463 = vstv %s462
    %v464 = vmul.f32 %v461, %v463
    %v465 = vadd.f32 %v406, %v464
    %s466 = sld [smem:[#allocation10 + $0x101]]
    %v467 = vstv %s466
    %v468 = vmul.f32 %v461, %v467
    %v469 = vadd.f32 %v410, %v468
    %s470 = sld [smem:[#allocation10 + $0x102]]
    %v471 = vstv %s470
    %v472 = vmul.f32 %v461, %v471
    %v473 = vadd.f32 %v414, %v472
    %s474 = sld [smem:[#allocation10 + $0x103]]
    %v475 = vstv %s474
    %v476 = vmul.f32 %v461, %v475
    %v477 = vadd.f32 %v418, %v476
    %s478 = scalar_lea.vmem [#allocation9], 256
    %v479 = vld [vmem:[%s478] sm:$0xff]
    %v480 = vld [vmem:[%s478 + $0x8] sm:$0xff]
    %v481 = vld [vmem:[%s478 + $0x10] sm:$0xff]
    %v482 = vld [vmem:[%s478 + $0x18] sm:$0xff]
    %v483 = vld [vmem:[%s478 + $0x20] sm:$0xff]
    %v484 = vld [vmem:[%s478 + $0x28] sm:$0xff]
    %v485 = vld [vmem:[%s478 + $0x30] sm:$0xff]
    %v486 = vld [vmem:[%s478 + $0x38] sm:$0xff]
    %v487 = vld [vmem:[%s478 + $0x40] sm:$0xff]
    %v488 = vld [vmem:[%s478 + $0x48] sm:$0xff]
    %v489 = vld [vmem:[%s478 + $0x50] sm:$0xff]
    %v490 = vld [vmem:[%s478 + $0x58] sm:$0xff]
    %v491 = vld [vmem:[%s478 + $0x60] sm:$0xff]
    %v492 = vld [vmem:[%s478 + $0x68] sm:$0xff]
    %v493 = vld [vmem:[%s478 + $0x70] sm:$0xff]
    %v494 = vld [vmem:[%s478 + $0x78] sm:$0xff]
    %s495 = scalar_lea.vmem %s10, 2
    %v496 = vld [vmem:[%s495] sm:$0x1]
    %v498 = vperm.slane %v496, 0
    %500 = vmatpush.msra.mxu0 %v494
    %501 = vmatpush.msra.mxu0 %v493
    %502 = vmatpush.msra.mxu0 %v492
    %503 = vmatpush.msra.mxu0 %v491
    %504 = vmatpush.msra.mxu0 %v490
    %505 = vmatpush.msra.mxu0 %v489
    %506 = vmatpush.msra.mxu0 %v488
    %507 = vmatpush.msra.mxu0 %v487
    %508 = vmatpush.msra.mxu0 %v486
    %509 = vmatpush.msra.mxu0 %v485
    %510 = vmatpush.msra.mxu0 %v484
    %511 = vmatpush.msra.mxu0 %v483
    %512 = vmatpush.msra.mxu0 %v482
    %513 = vmatpush.msra.mxu0 %v481
    %514 = vmatpush.msra.mxu0 %v480
    %515 = vmatpush.msra.mxu0 %v479
    %516 = vmatmul.f32.gmra.mxu0 %v337
    %v517 = vpop.f32.mrf.mxu0
    %v518 = vadd.f32 %v498, %v517
    %519 = vdwg.mxu0
    %v520 = vtanh.pop %v518
    %s521 = sld [smem:[#allocation10 + $0x180]]
    %v522 = vstv %s521
    %v523 = vmul.f32 %v520, %v522
    %v524 = vadd.f32 %v465, %v523
    %s525 = sld [smem:[#allocation10 + $0x181]]
    %v526 = vstv %s525
    %v527 = vmul.f32 %v520, %v526
    %v528 = vadd.f32 %v469, %v527
    %s529 = sld [smem:[#allocation10 + $0x182]]
    %v530 = vstv %s529
    %v531 = vmul.f32 %v520, %v530
    %v532 = vadd.f32 %v473, %v531
    %s533 = sld [smem:[#allocation10 + $0x183]]
    %v534 = vstv %s533
    %v535 = vmul.f32 %v520, %v534
    %v536 = vadd.f32 %v477, %v535
    %s537 = scalar_lea.vmem [#allocation9], 384
    %v538 = vld [vmem:[%s537] sm:$0xff]
    %v539 = vld [vmem:[%s537 + $0x8] sm:$0xff]
    %v540 = vld [vmem:[%s537 + $0x10] sm:$0xff]
    %v541 = vld [vmem:[%s537 + $0x18] sm:$0xff]
    %v542 = vld [vmem:[%s537 + $0x20] sm:$0xff]
    %v543 = vld [vmem:[%s537 + $0x28] sm:$0xff]
    %v544 = vld [vmem:[%s537 + $0x30] sm:$0xff]
    %v545 = vld [vmem:[%s537 + $0x38] sm:$0xff]
    %v546 = vld [vmem:[%s537 + $0x40] sm:$0xff]
    %v547 = vld [vmem:[%s537 + $0x48] sm:$0xff]
    %v548 = vld [vmem:[%s537 + $0x50] sm:$0xff]
    %v549 = vld [vmem:[%s537 + $0x58] sm:$0xff]
    %v550 = vld [vmem:[%s537 + $0x60] sm:$0xff]
    %v551 = vld [vmem:[%s537 + $0x68] sm:$0xff]
    %v552 = vld [vmem:[%s537 + $0x70] sm:$0xff]
    %v553 = vld [vmem:[%s537 + $0x78] sm:$0xff]
    %s554 = scalar_lea.vmem %s10, 3
    %v555 = vld [vmem:[%s554] sm:$0x1]
    %v557 = vperm.slane %v555, 0
    %559 = vmatpush.msra.mxu0 %v553
    %560 = vmatpush.msra.mxu0 %v552
    %561 = vmatpush.msra.mxu0 %v551
    %562 = vmatpush.msra.mxu0 %v550
    %563 = vmatpush.msra.mxu0 %v549
    %564 = vmatpush.msra.mxu0 %v548
    %565 = vmatpush.msra.mxu0 %v547
    %566 = vmatpush.msra.mxu0 %v546
    %567 = vmatpush.msra.mxu0 %v545
    %568 = vmatpush.msra.mxu0 %v544
    %569 = vmatpush.msra.mxu0 %v543
    %570 = vmatpush.msra.mxu0 %v542
    %571 = vmatpush.msra.mxu0 %v541
    %572 = vmatpush.msra.mxu0 %v540
    %573 = vmatpush.msra.mxu0 %v539
    %574 = vmatpush.msra.mxu0 %v538
    %575 = vmatmul.f32.gmra.mxu0 %v337
    %v576 = vpop.f32.mrf.mxu0
    %v577 = vadd.f32 %v557, %v576
    %578 = vdwg.mxu0
    %v579 = vtanh.pop %v577
    %s580 = sld [smem:[#allocation10 + $0x200]]
    %v581 = vstv %s580
    %v582 = vmul.f32 %v579, %v581
    %v583 = vadd.f32 %v524, %v582
    %s584 = sld [smem:[#allocation10 + $0x201]]
    %v585 = vstv %s584
    %v586 = vmul.f32 %v579, %v585
    %v587 = vadd.f32 %v528, %v586
    %s588 = sld [smem:[#allocation10 + $0x202]]
    %v589 = vstv %s588
    %v590 = vmul.f32 %v579, %v589
    %v591 = vadd.f32 %v532, %v590
    %s592 = sld [smem:[#allocation10 + $0x203]]
    %v593 = vstv %s592
    %v594 = vmul.f32 %v579, %v593
    %v595 = vadd.f32 %v536, %v594
    %s596 = sld [smem:[#allocation2]]
    %v597 = vstv %s596
    %v598 = vadd.f32 %v597, 0.0
    %v599 = vtanh.pop %v583
    %s600 = sld [smem:[#allocation13]]
    %v601 = vstv %s600
    %v602 = vmul.f32 %v599, %v601
    %v603 = vadd.f32 %v598, %v602
    %v604 = vtanh.pop %v587
    %s605 = sld [smem:[#allocation13 + $0x80]]
    %v606 = vstv %s605
    %v607 = vmul.f32 %v604, %v606
    %v608 = vadd.f32 %v603, %v607
    %v609 = vtanh.pop %v591
    %s610 = sld [smem:[#allocation13 + $0x100]]
    %v611 = vstv %s610
    %v612 = vmul.f32 %v609, %v611
    %v613 = vadd.f32 %v608, %v612
    %v614 = vtanh.pop %v595
    %s615 = sld [smem:[#allocation13 + $0x180]]
    %v616 = vstv %s615
    %v617 = vmul.f32 %v614, %v616
    %v618 = vadd.f32 %v613, %v617
    %v619 = vxor.u32 %v618, 2147483648
    %v620 = vmul.f32 %v619, 1.442695
    %v621 = vpow.pop %v620
    %v622 = vadd.f32 %v621, 1.0
    %v623 = vrcp.pop %v622
    %v624 = vmul.f32 %v622, %v623
    %v625 = vsub.f32 1.0, %v624
    %v626 = vmul.f32 %v623, %v625
    %v627 = vadd.f32 %v623, %v626
    %vm628 = vweird.f32 %v622
    %vm629 = vweird.f32 %v623
    %vm630 = vmor %vm628, %vm629
    %v631 = vsel %vm630, %v623, %v627
    %v632 = vand.u32 2147483647, %v622
    %vm633 = vcmp.eq.f32.partialorder %v632, 8.507059e+37
    %v634 = vand.u32 %v622, 2147483648
    %v635 = vor.u32 1.1754944e-38, %v634
    %v636 = vsel %vm633, %v635, %v631
    %v637 = vmul.f32 1.0, %v636
    %638 = vst [vmem:[#allocation14] sm:$0xff] %v637
    // Predicated region
    $region86: #{tpu_custom_call.1} parent=1 // pred_check
      _
    $region87: #{tpu_custom_call.1} parent=1 // pred_check_branch
      %640 = sbr.rel (0) target = $region89
    $region88: #{tpu_custom_call.1} parent=1 // pred_region
      %642 = vsyncadd [#allocation5], 0
      %s644 = sshll.u32 [#allocation14], 4
      %s645 = int_to_ptr.vmem [resolvable:$true] %s644
      %s646 = sshll.u32 %s15, 4
      %s647 = int_to_ptr.hbm [resolvable:$true] %s646
      %649 = dma.vmem_to_hbm [thread:$0]  %s645, 128, %s647, [#allocation5]
    $region89: #{tpu_custom_call.1} parent=1 // pred_fallthru
      _
    // Predicated region
    $region90: #{tpu_custom_call.1} parent=1 // pred_check
      _
    $region91: #{tpu_custom_call.1} parent=1 // pred_check_branch
      %651 = sbr.rel (0) target = $region93
    $region92: #{tpu_custom_call.1} parent=1 // pred_region
      %653 = dma.done [#allocation5], 128
    $region93: #{tpu_custom_call.1} parent=1 // pred_fallthru
      _
    %654 = vsyncpa [#allocation4], 1
    %655 = vsyncpa [#allocation8], 1
    %656 = vsyncpa [#allocation5], 1
    %657 = vsyncpa [#allocation6], 1
    %658 = vsyncpa [#allocation12], 1

</llo_original>
